<compile_context>
chip_gen: v7x
topology: tpu7x:2x2x1
jax: 0.10.0
libtpu: 0.0.40
codegen_flags: <defaults>
</compile_context>

<pallas_src>
import functools

import jax
import jax.numpy as jnp
import numpy as np
from jax import lax
from jax.experimental import pallas as pl
from jax.experimental.pallas import tpu as pltpu

BN_EPS = 1e-5


# -----------------------------------------------------------------------------
# Static slab layout (row offsets for the packed weight / bias slabs).
# -----------------------------------------------------------------------------
def _slab_layout(embed_dim, layer_mults):
    Q = 3 * embed_dim
    chans = [Q] + [Q * m for m in layer_mults]

    # bf16 weight slab: every weight's rows start at a multiple of 16
    # (bf16 sublane packing) so static ref slices stay tile-aligned.
    wmeta, row = {}, 0

    def _add(name, k, n):
        nonlocal row
        wmeta[name] = (row, k, n)
        row = ((row + k + 15) // 16) * 16

    _add('w0', 9 * Q, Q)                       # 3x3 conv (im2col form)
    for i in range(len(layer_mults)):
        ci, co = chans[i], chans[i + 1]
        _add(f'w{i + 1}ar', ci, 2 * co)        # fused (net-conv-a || res-conv)
        _add(f'w{i + 1}b', co, co)             # net-conv-b
    wrows = max(row, 16)
    wcols = max(n for (_, _, n) in wmeta.values())

    # f32 bias / scalar / projection slab: one row per item.
    names, widths = ['b0'], [Q]
    for i in range(len(layer_mults)):
        co = chans[i + 1]
        names += [f'b{i + 1}ar', f'b{i + 1}b']
        widths += [2 * co, co]
    names += ['sc', 'pw']                      # [proj_b, exp(temp), sm_bias], proj weights
    widths += [4, chans[-1]]
    brow = {nm: r for r, nm in enumerate(names)}
    brows = ((len(names) + 7) // 8) * 8
    bcols = ((max(widths) + 127) // 128) * 128
    return wmeta, wrows, wcols, brow, brows, bcols


# -----------------------------------------------------------------------------
# Pallas kernel factory: 3x3 conv -> residual 1x1 blocks -> projection ->
# per-batch SpatialSoftmax.  One grid step handles BP batches (M = BP*HW rows).
# -----------------------------------------------------------------------------
def _make_kernel(HW, BP, nblocks, wmeta, brow):
    def kernel(x_ref, w_ref, b_ref, out_ref):
        f32, bf16 = jnp.float32, jnp.bfloat16

        def wget(name):
            o, k, n = wmeta[name]
            return w_ref[o:o + k, 0:n]                      # bf16 [k, n]

        def bget(name, n):
            r = brow[name]
            return b_ref[r:r + 1, 0:n]                      # f32 [1, n]

        x = x_ref[0]                                        # [M, 9Q] bf16

        # query[0]: 3x3 conv (im2col matmul) + bias, ReLU.
        n0 = wmeta['w0'][2]
        h = jnp.dot(x, wget('w0'), preferred_element_type=f32) + bget('b0', n0)
        h = jnp.maximum(h, 0.0)

        # FeatureProc blocks: one fused dot for the shared-LHS (net-a || res)
        # paths, then the second net conv; BN folded into weights/biases.
        for i in range(1, nblocks + 1):
            n2 = wmeta[f'w{i}ar'][2]
            co = n2 // 2
            t = jnp.dot(h.astype(bf16), wget(f'w{i}ar'),
                        preferred_element_type=f32) + bget(f'b{i}ar', n2)
            a = jnp.maximum(t[:, 0:co], 0.0)                # net path (ReLU)
            r = t[:, co:n2]                                 # residual path
            n = jnp.dot(a.astype(bf16), wget(f'w{i}b'),
                        preferred_element_type=f32) + bget(f'b{i}b', co)
            h = jnp.maximum(n + r, 0.0)                     # [M, co] f32

        # Linear projection computed transposed so the logits land lane-dense:
        # att[1, M] = pw[1, C] . h[M, C]^T
        cout = h.shape[1]
        pwT = bget('pw', cout)
        att = lax.dot_general(pwT, h, (((1,), (1,)), ((), ())),
                              preferred_element_type=f32)   # [1, M]
        sr = brow['sc']
        att = att + b_ref[sr:sr + 1, 0:1]                   # + proj bias

        # SpatialSoftmax: softmax(exp(temp) * relu(att) + bias) per batch.
        z = b_ref[sr:sr + 1, 1:2] * jnp.maximum(att, 0.0) + b_ref[sr:sr + 1, 2:3]
        rows = []
        for bi in range(BP):
            zb = z[:, bi * HW:(bi + 1) * HW]                # [1, HW]
            zb = zb - jnp.max(zb, axis=-1, keepdims=True)
            e = jnp.exp(zb)
            s = jnp.sum(e, axis=-1, keepdims=True)
            rows.append(e * pl.reciprocal(s, approx=True))
        out_ref[0] = rows[0] if BP == 1 else jnp.concatenate(rows, axis=0)

    return kernel


# -----------------------------------------------------------------------------
# Parameter initialization (deterministic, synthetic).
# -----------------------------------------------------------------------------
def init_params(key, embed_dim, attrib_offsets, layer_mults=(2, 2)):
    E = embed_dim
    Q = 3 * E
    total_attribs = attrib_offsets[-1]
    n_attr_cols = len(attrib_offsets) - 1

    ks = iter(jax.random.split(key, 64))
    nrm = lambda shape, s=0.1: s * jax.random.normal(next(ks), shape, jnp.float32)

    def bn_params(c):
        # (gamma, beta, running_mean, running_var) — synthetic but deterministic.
        return (1.0 + nrm((c,)), nrm((c,)), nrm((c,)), 0.5 + jnp.abs(nrm((c,), 0.2)))

    P = {}
    P['attrib_offsets'] = jnp.array(attrib_offsets, jnp.int32)
    P['attrib_emb'] = nrm((total_attribs, E), 0.5)                     # nn.Embedding
    P['dir_emb'] = nrm((4, E * n_attr_cols), 0.5)                      # nn.Embedding
    P['conv0_w'] = nrm((Q, Q, 3, 3))                                   # Conv2d 3x3 (OIHW)
    P['conv0_b'] = nrm((Q,))

    chans = [Q] + [Q * m for m in layer_mults]
    blocks = []
    for i in range(len(layer_mults)):
        ci, co = chans[i], chans[i + 1]
        blocks.append(dict(
            w_a=nrm((co, ci, 1, 1)), bn_a=bn_params(co),
            w_b=nrm((co, co, 1, 1)), bn_b=bn_params(co),
            w_r=nrm((co, ci, 1, 1)), bn_r=bn_params(co)))
    P['blocks'] = blocks

    P['proj_w'] = nrm((1, chans[-1]))                                  # nn.Linear
    P['proj_b'] = nrm(())
    P['temp'] = jnp.float32(0.0)                                       # SpatialSoftmax init
    P['sm_bias'] = jnp.float32(0.0)
    return P


def fold_params(P, embed_dim, layer_mults):
    """Fold eval-mode BN into the 1x1 convs and pack everything into one bf16
    weight slab + one small f32 bias/scalar slab (2 weight DMAs per call)."""
    wmeta, wrows, wcols, brow, brows, bcols = _slab_layout(embed_dim, layer_mults)

    def fold(w_oihw, bn):
        g, b, m, v = bn
        scale = g / jnp.sqrt(v + BN_EPS)                               # per out-channel
        W = (w_oihw[:, :, 0, 0] * scale[:, None]).T                    # [Cin, Cout]
        bias = b - m * scale                                           # [Cout]
        return W, bias

    wslab = jnp.zeros((wrows, wcols), jnp.bfloat16)
    bslab = jnp.zeros((brows, bcols), jnp.float32)

    def put_w(slab, name, W):
        o, k, n = wmeta[name]
        return slab.at[o:o + k, 0:n].set(W.astype(jnp.bfloat16))

    def put_b(slab, name, v):
        return slab.at[brow[name], 0:v.shape[0]].set(v.astype(jnp.float32))

    Ci = P['conv0_w'].shape[1]
    w0 = jnp.transpose(P['conv0_w'], (2, 3, 1, 0)).reshape(9 * Ci, -1)  # [9Q, Q]
    wslab = put_w(wslab, 'w0', w0)
    bslab = put_b(bslab, 'b0', P['conv0_b'])

    for i, blk in enumerate(P['blocks'], 1):
        wa, ba = fold(blk['w_a'], blk['bn_a'])
        wb, bb = fold(blk['w_b'], blk['bn_b'])
        wr, br = fold(blk['w_r'], blk['bn_r'])
        wslab = put_w(wslab, f'w{i}ar', jnp.concatenate([wa, wr], axis=1))
        wslab = put_w(wslab, f'w{i}b', wb)
        bslab = put_b(bslab, f'b{i}ar', jnp.concatenate([ba, br]))
        bslab = put_b(bslab, f'b{i}b', bb)

    bslab = put_b(bslab, 'pw', P['proj_w'][0])                          # projection row
    sc = jnp.stack([P['proj_b'], jnp.exp(P['temp']), P['sm_bias']])     # exp(temp) precomputed
    bslab = put_b(bslab, 'sc', sc)
    return wslab, bslab


# -----------------------------------------------------------------------------
# Plain-JAX glue: embeddings + concat (equivalent to in_vectors, NHWC).
# -----------------------------------------------------------------------------
def build_in_vectors(image, direction, P, embed_dim):
    offs = P['attrib_offsets'][: image.shape[-1]]
    emb = P['attrib_emb'][image + offs]                                # [B,H,W,A,E]
    cat = emb.reshape(emb.shape[:-2] + (-1,))                          # [B,H,W,A*E]
    d = P['dir_emb'][direction][:, None, None, :]                      # [B,1,1,A*E]
    bdir = jnp.broadcast_to(d, cat.shape)
    return jnp.concatenate([bdir[..., :embed_dim], cat], axis=-1)      # [B,H,W,3E]


def _num_grid_splits(batch):
    """One grid step per TensorCore: 2 on multi-TC chips (v7x / v5p / v4), else 1
    so the whole batch is fused into a single M = B*HW matmul pass."""
    try:
        kind = jax.devices()[0].device_kind.lower()
    except Exception:
        kind = ""
    cores = 2 if any(t in kind for t in ("v7", "v5p", "v4")) else 1
    g = min(batch, cores)
    while g > 1 and batch % g:
        g -= 1
    return max(g, 1)


# -----------------------------------------------------------------------------
# Kernel wrapper (ImageComponentsToMask.forward), jitted.
# -----------------------------------------------------------------------------
@functools.partial(jax.jit, static_argnames=("embed_dim", "layer_mults"))
def image_components_to_mask(image, direction, P, wslab, bslab, embed_dim, layer_mults):
    x = build_in_vectors(image, direction, P, embed_dim)               # NHWC [B,H,W,Q]
    B, H, W, Q = x.shape
    HW = H * W
    G = _num_grid_splits(B)                                            # grid steps (cores)
    BP = B // G                                                        # batches per step
    M = BP * HW                                                        # matmul rows per step

    # im2col for the 3x3 / padding=1 conv; batch folded into the M dimension.
    xp = jnp.pad(x, ((0, 0), (1, 1), (1, 1), (0, 0)))
    patches = jnp.stack([xp[:, kh:kh + H, kw:kw + W, :]
                         for kh in range(3) for kw in range(3)], axis=3)
    patches = patches.reshape(G, M, 9 * Q).astype(jnp.bfloat16)

    wmeta, wrows, wcols, brow, brows, bcols = _slab_layout(embed_dim, layer_mults)
    kernel = _make_kernel(HW, BP, len(layer_mults), wmeta, brow)

    out = pl.pallas_call(
        kernel,
        out_shape=jax.ShapeDtypeStruct((G, BP, HW), jnp.float32),      # lane-dense output
        grid_spec=pltpu.PrefetchScalarGridSpec(
            num_scalar_prefetch=0,
            grid=(G,),
            in_specs=[
                pl.BlockSpec((1, M, 9 * Q), lambda g: (g, 0, 0)),      # patches
                pl.BlockSpec((wrows, wcols), lambda g: (0, 0)),        # bf16 weight slab
                pl.BlockSpec((brows, bcols), lambda g: (0, 0)),        # f32 bias/scalar slab
            ],
            out_specs=pl.BlockSpec((1, BP, HW), lambda g: (g, 0, 0))),
        compiler_params=pltpu.CompilerParams(
            dimension_semantics=("parallel",)),
    )(patches, wslab, bslab)

    return out.reshape(B, 1, H, W)                                     # [B, 1, H, W]


# -----------------------------------------------------------------------------
# Pure-JAX reference (mirrors the PyTorch module, eval-mode BN) for verification.
# -----------------------------------------------------------------------------
def reference_forward(image, direction, P, embed_dim):
    x = build_in_vectors(image, direction, P, embed_dim)               # NHWC
    B, H, W, _ = x.shape

    def conv1x1(a, w_oihw):
        return jnp.einsum('bhwc,oc->bhwo', a, w_oihw[:, :, 0, 0])

    def bn(a, g, b, m, v):
        return (a - m) / jnp.sqrt(v + BN_EPS) * g + b

    w0 = jnp.transpose(P['conv0_w'], (2, 3, 1, 0))                     # HWIO
    h = lax.conv_general_dilated(x, w0, (1, 1), 'SAME',
                                 dimension_numbers=('NHWC', 'HWIO', 'NHWC'))
    h = jnp.maximum(h + P['conv0_b'], 0.0)

    def block(a, p):
        t = jnp.maximum(bn(conv1x1(a, p['w_a']), *p['bn_a']), 0.0)
        n = bn(conv1x1(t, p['w_b']), *p['bn_b'])
        r = bn(conv1x1(a, p['w_r']), *p['bn_r'])
        return jnp.maximum(n + r, 0.0)

    for p in P['blocks']:
        h = block(h, p)

    att = jnp.einsum('bhwc,oc->bhwo', h, P['proj_w'])[..., 0] + P['proj_b']  # [B,H,W]
    aw = att[:, None, :, :]                                            # [B,1,H,W]
    z = jnp.exp(P['temp']) * jnp.maximum(aw.reshape(B, 1, H * W), 0.0) + P['sm_bias']
    return jax.nn.softmax(z, axis=-1).reshape(B, 1, H, W)


if __name__ == "__main__":
    embed_dim = 8
    attrib_offsets = [0, 6, 12]        # 2 attribute columns, 12 total attribs
    layer_mults = (2, 2)
    B, H, W = 2, 8, 8
    A = len(attrib_offsets) - 1

    key = jax.random.PRNGKey(0)
    kp, ki, kd = jax.random.split(key, 3)
    P = init_params(kp, embed_dim, attrib_offsets, layer_mults=layer_mults)

    image = jax.random.randint(ki, (B, H, W, A), 0, 6, dtype=jnp.int32)
    direction = jax.random.randint(kd, (B,), 0, 4, dtype=jnp.int32)

    # Fold BN + pack weight slabs ONCE, outside the per-call path.
    wslab, bslab = fold_params(P, embed_dim, layer_mults)

    out = image_components_to_mask(image, direction, P, wslab, bslab,
                                   embed_dim=embed_dim, layer_mults=layer_mults)
    out = jax.block_until_ready(out)

    ref = reference_forward(image, direction, P, embed_dim)
    assert out.shape == (B, 1, H, W)
    # bf16 matmul inputs -> slightly looser tolerance than the pure-f32 reference.
    np.testing.assert_allclose(np.asarray(out), np.asarray(ref), atol=3e-3, rtol=3e-2)
    # attention masks sum to ~1 over spatial positions (approx reciprocal in softmax).
    np.testing.assert_allclose(np.asarray(out.sum(axis=(-1, -2))), 1.0, atol=2e-3)

    print("KERNEL_OK")
</pallas_src>

<mosaic_0001>
module attributes {stable_mosaic.version = 11 : i64} {
  func.func @kernel(%arg0: i32, %arg1: memref<1x128x216xbf16, #tpu.memory_space<vmem>>, %arg2: memref<400x96xbf16, #tpu.memory_space<vmem>>, %arg3: memref<8x128xf32, #tpu.memory_space<vmem>>, %arg4: memref<1x2x64xf32, #tpu.memory_space<vmem>>) attributes {dimension_semantics = [#tpu.dimension_semantics<parallel>], iteration_bounds = array<i64: 1>, scalar_prefetch = 0 : i64, scratch_operands = 0 : i64, tpu.core_type = #tpu.core_type<tc>, window_params = [{transform_indices = @transform_0, window_bounds = array<i64: 1, 128, 216>}, {pipeline_mode = #tpu.pipeline_mode<synchronous>, transform_indices = @transform_1, window_bounds = array<i64: 400, 96>}, {pipeline_mode = #tpu.pipeline_mode<synchronous>, transform_indices = @transform_2, window_bounds = array<i64: 8, 128>}, {transform_indices = @transform_3, window_bounds = array<i64: 1, 2, 64>}]} {
    %c0 = arith.constant 0 : index
    %c0_0 = arith.constant 0 : index
    %c0_1 = arith.constant 0 : index
    %0 = vector.load %arg1[%c0, %c0_0, %c0_1] : memref<1x128x216xbf16, #tpu.memory_space<vmem>>, vector<1x128x216xbf16>
    %1 = vector.shape_cast %0 : vector<1x128x216xbf16> to vector<128x216xbf16>
    %c0_2 = arith.constant 0 : index
    %c0_3 = arith.constant 0 : index
    %2 = vector.load %arg2[%c0_2, %c0_3] : memref<400x96xbf16, #tpu.memory_space<vmem>>, vector<216x24xbf16>
    %cst = arith.constant dense<0.000000e+00> : vector<128x24xf32>
    %3 = tpu.matmul %1, %2, %cst {dimension_numbers = #tpu.dot_dimension_numbers<[1], [0], [0], [1], [0, 0, 1, 1], [], []>} : vector<128x216xbf16>, vector<216x24xbf16>, vector<128x24xf32> -> vector<128x24xf32>
    %c0_4 = arith.constant 0 : index
    %c0_5 = arith.constant 0 : index
    %4 = vector.load %arg3[%c0_4, %c0_5] : memref<8x128xf32, #tpu.memory_space<vmem>>, vector<1x24xf32>
    %5 = vector.broadcast %4 : vector<1x24xf32> to vector<128x24xf32>
    %6 = arith.addf %3, %5 : vector<128x24xf32>
    %cst_6 = arith.constant 0.000000e+00 : f32
    %7 = vector.broadcast %cst_6 : f32 to vector<128x24xf32>
    %8 = arith.maximumf %6, %7 : vector<128x24xf32>
    %9 = arith.truncf %8 : vector<128x24xf32> to vector<128x24xbf16>
    %c224 = arith.constant 224 : index
    %c0_7 = arith.constant 0 : index
    %10 = vector.load %arg2[%c224, %c0_7] : memref<400x96xbf16, #tpu.memory_space<vmem>>, vector<24x96xbf16>
    %cst_8 = arith.constant dense<0.000000e+00> : vector<128x96xf32>
    %11 = tpu.matmul %9, %10, %cst_8 {dimension_numbers = #tpu.dot_dimension_numbers<[1], [0], [0], [1], [0, 0, 1, 1], [], []>} : vector<128x24xbf16>, vector<24x96xbf16>, vector<128x96xf32> -> vector<128x96xf32>
    %c1 = arith.constant 1 : index
    %c0_9 = arith.constant 0 : index
    %12 = vector.load %arg3[%c1, %c0_9] : memref<8x128xf32, #tpu.memory_space<vmem>>, vector<1x96xf32>
    %13 = vector.broadcast %12 : vector<1x96xf32> to vector<128x96xf32>
    %14 = arith.addf %11, %13 : vector<128x96xf32>
    %15 = vector.extract_strided_slice %14 {offsets = [0, 0], sizes = [128, 48], strides = [1, 1]} : vector<128x96xf32> to vector<128x48xf32>
    %cst_10 = arith.constant 0.000000e+00 : f32
    %16 = vector.broadcast %cst_10 : f32 to vector<128x48xf32>
    %17 = arith.maximumf %15, %16 : vector<128x48xf32>
    %18 = vector.extract_strided_slice %14 {offsets = [0, 48], sizes = [128, 48], strides = [1, 1]} : vector<128x96xf32> to vector<128x48xf32>
    %19 = arith.truncf %17 : vector<128x48xf32> to vector<128x48xbf16>
    %c256 = arith.constant 256 : index
    %c0_11 = arith.constant 0 : index
    %20 = vector.load %arg2[%c256, %c0_11] : memref<400x96xbf16, #tpu.memory_space<vmem>>, vector<48x48xbf16>
    %cst_12 = arith.constant dense<0.000000e+00> : vector<128x48xf32>
    %21 = tpu.matmul %19, %20, %cst_12 {dimension_numbers = #tpu.dot_dimension_numbers<[1], [0], [0], [1], [0, 0, 1, 1], [], []>} : vector<128x48xbf16>, vector<48x48xbf16>, vector<128x48xf32> -> vector<128x48xf32>
    %c2 = arith.constant 2 : index
    %c0_13 = arith.constant 0 : index
    %22 = vector.load %arg3[%c2, %c0_13] : memref<8x128xf32, #tpu.memory_space<vmem>>, vector<1x48xf32>
    %23 = vector.broadcast %22 : vector<1x48xf32> to vector<128x48xf32>
    %24 = arith.addf %21, %23 : vector<128x48xf32>
    %25 = arith.addf %24, %18 : vector<128x48xf32>
    %cst_14 = arith.constant 0.000000e+00 : f32
    %26 = vector.broadcast %cst_14 : f32 to vector<128x48xf32>
    %27 = arith.maximumf %25, %26 : vector<128x48xf32>
    %28 = arith.truncf %27 : vector<128x48xf32> to vector<128x48xbf16>
    %c304 = arith.constant 304 : index
    %c0_15 = arith.constant 0 : index
    %29 = vector.load %arg2[%c304, %c0_15] : memref<400x96xbf16, #tpu.memory_space<vmem>>, vector<48x96xbf16>
    %cst_16 = arith.constant dense<0.000000e+00> : vector<128x96xf32>
    %30 = tpu.matmul %28, %29, %cst_16 {dimension_numbers = #tpu.dot_dimension_numbers<[1], [0], [0], [1], [0, 0, 1, 1], [], []>} : vector<128x48xbf16>, vector<48x96xbf16>, vector<128x96xf32> -> vector<128x96xf32>
    %c3 = arith.constant 3 : index
    %c0_17 = arith.constant 0 : index
    %31 = vector.load %arg3[%c3, %c0_17] : memref<8x128xf32, #tpu.memory_space<vmem>>, vector<1x96xf32>
    %32 = vector.broadcast %31 : vector<1x96xf32> to vector<128x96xf32>
    %33 = arith.addf %30, %32 : vector<128x96xf32>
    %34 = vector.extract_strided_slice %33 {offsets = [0, 0], sizes = [128, 48], strides = [1, 1]} : vector<128x96xf32> to vector<128x48xf32>
    %cst_18 = arith.constant 0.000000e+00 : f32
    %35 = vector.broadcast %cst_18 : f32 to vector<128x48xf32>
    %36 = arith.maximumf %34, %35 : vector<128x48xf32>
    %37 = vector.extract_strided_slice %33 {offsets = [0, 48], sizes = [128, 48], strides = [1, 1]} : vector<128x96xf32> to vector<128x48xf32>
    %38 = arith.truncf %36 : vector<128x48xf32> to vector<128x48xbf16>
    %c352 = arith.constant 352 : index
    %c0_19 = arith.constant 0 : index
    %39 = vector.load %arg2[%c352, %c0_19] : memref<400x96xbf16, #tpu.memory_space<vmem>>, vector<48x48xbf16>
    %cst_20 = arith.constant dense<0.000000e+00> : vector<128x48xf32>
    %40 = tpu.matmul %38, %39, %cst_20 {dimension_numbers = #tpu.dot_dimension_numbers<[1], [0], [0], [1], [0, 0, 1, 1], [], []>} : vector<128x48xbf16>, vector<48x48xbf16>, vector<128x48xf32> -> vector<128x48xf32>
    %c4 = arith.constant 4 : index
    %c0_21 = arith.constant 0 : index
    %41 = vector.load %arg3[%c4, %c0_21] : memref<8x128xf32, #tpu.memory_space<vmem>>, vector<1x48xf32>
    %42 = vector.broadcast %41 : vector<1x48xf32> to vector<128x48xf32>
    %43 = arith.addf %40, %42 : vector<128x48xf32>
    %44 = arith.addf %43, %37 : vector<128x48xf32>
    %cst_22 = arith.constant 0.000000e+00 : f32
    %45 = vector.broadcast %cst_22 : f32 to vector<128x48xf32>
    %46 = arith.maximumf %44, %45 : vector<128x48xf32>
    %c6 = arith.constant 6 : index
    %c0_23 = arith.constant 0 : index
    %47 = vector.load %arg3[%c6, %c0_23] : memref<8x128xf32, #tpu.memory_space<vmem>>, vector<1x48xf32>
    %cst_24 = arith.constant dense<0.000000e+00> : vector<1x128xf32>
    %48 = tpu.matmul %47, %46, %cst_24 {dimension_numbers = #tpu.dot_dimension_numbers<[1], [1], [0], [0], [0, 0, 1, 0], [], []>} : vector<1x48xf32>, vector<128x48xf32>, vector<1x128xf32> -> vector<1x128xf32>
    %c5 = arith.constant 5 : index
    %c0_25 = arith.constant 0 : index
    %49 = vector.load %arg3[%c5, %c0_25] : memref<8x128xf32, #tpu.memory_space<vmem>>, vector<1x1xf32>
    %50 = vector.broadcast %49 : vector<1x1xf32> to vector<1x128xf32>
    %51 = arith.addf %48, %50 : vector<1x128xf32>
    %c5_26 = arith.constant 5 : index
    %c1_27 = arith.constant 1 : index
    %52 = vector.load %arg3[%c5_26, %c1_27] : memref<8x128xf32, #tpu.memory_space<vmem>>, vector<1x1xf32>
    %cst_28 = arith.constant 0.000000e+00 : f32
    %53 = vector.broadcast %cst_28 : f32 to vector<1x128xf32>
    %54 = arith.maximumf %51, %53 : vector<1x128xf32>
    %55 = vector.broadcast %52 : vector<1x1xf32> to vector<1x128xf32>
    %56 = arith.mulf %55, %54 : vector<1x128xf32>
    %c5_29 = arith.constant 5 : index
    %c2_30 = arith.constant 2 : index
    %57 = vector.load %arg3[%c5_29, %c2_30] : memref<8x128xf32, #tpu.memory_space<vmem>>, vector<1x1xf32>
    %58 = vector.broadcast %57 : vector<1x1xf32> to vector<1x128xf32>
    %59 = arith.addf %56, %58 : vector<1x128xf32>
    %60 = vector.extract_strided_slice %59 {offsets = [0, 0], sizes = [1, 64], strides = [1, 1]} : vector<1x128xf32> to vector<1x64xf32>
    %cst_31 = arith.constant dense<0xFF800000> : vector<1xf32>
    %61 = vector.multi_reduction <maximumf>, %60, %cst_31 [1] : vector<1x64xf32> to vector<1xf32>
    %62 = vector.shape_cast %61 : vector<1xf32> to vector<1x1xf32>
    %63 = vector.broadcast %62 : vector<1x1xf32> to vector<1x64xf32>
    %64 = arith.subf %60, %63 : vector<1x64xf32>
    %65 = math.exp %64 : vector<1x64xf32>
    %cst_32 = arith.constant dense<0.000000e+00> : vector<1xf32>
    %66 = vector.multi_reduction <add>, %65, %cst_32 [1] : vector<1x64xf32> to vector<1xf32>
    %67 = vector.shape_cast %66 : vector<1xf32> to vector<1x1xf32>
    %68 = tpu.reciprocal %67 {approx = true} : vector<1x1xf32> -> vector<1x1xf32>
    %69 = vector.broadcast %68 : vector<1x1xf32> to vector<1x64xf32>
    %70 = arith.mulf %65, %69 : vector<1x64xf32>
    %71 = vector.extract_strided_slice %59 {offsets = [0, 64], sizes = [1, 64], strides = [1, 1]} : vector<1x128xf32> to vector<1x64xf32>
    %cst_33 = arith.constant dense<0xFF800000> : vector<1xf32>
    %72 = vector.multi_reduction <maximumf>, %71, %cst_33 [1] : vector<1x64xf32> to vector<1xf32>
    %73 = vector.shape_cast %72 : vector<1xf32> to vector<1x1xf32>
    %74 = vector.broadcast %73 : vector<1x1xf32> to vector<1x64xf32>
    %75 = arith.subf %71, %74 : vector<1x64xf32>
    %76 = math.exp %75 : vector<1x64xf32>
    %cst_34 = arith.constant dense<0.000000e+00> : vector<1xf32>
    %77 = vector.multi_reduction <add>, %76, %cst_34 [1] : vector<1x64xf32> to vector<1xf32>
    %78 = vector.shape_cast %77 : vector<1xf32> to vector<1x1xf32>
    %79 = tpu.reciprocal %78 {approx = true} : vector<1x1xf32> -> vector<1x1xf32>
    %80 = vector.broadcast %79 : vector<1x1xf32> to vector<1x64xf32>
    %81 = arith.mulf %76, %80 : vector<1x64xf32>
    %82 = tpu.concatenate %70, %81 in 0 : vector<1x64xf32>, vector<1x64xf32> -> vector<2x64xf32>
    %c0_35 = arith.constant 0 : index
    %c0_36 = arith.constant 0 : index
    %c0_37 = arith.constant 0 : index
    %83 = vector.load %arg4[%c0_35, %c0_36, %c0_37] : memref<1x2x64xf32, #tpu.memory_space<vmem>>, vector<1x2x64xf32>
    %84 = vector.shape_cast %83 : vector<1x2x64xf32> to vector<2x64xf32>
    %85 = vector.shape_cast %82 : vector<2x64xf32> to vector<1x2x64xf32>
    tpu.vector_store %arg4[%c0_35, %c0_36, %c0_37], %85 {strides = array<i32>} : memref<1x2x64xf32, #tpu.memory_space<vmem>>, vector<1x2x64xf32>,
    return
  }
  func.func @transform_0(%arg0: i32) -> (i32, i32, i32) {
    %c0_i32 = arith.constant 0 : i32
    %c0_i32_0 = arith.constant 0 : i32
    %c0_i32_1 = arith.constant 0 : i32
    return %arg0, %c0_i32, %c0_i32_0 : i32, i32, i32
  }
  func.func @transform_1(%arg0: i32) -> (i32, i32) {
    %c0_i32 = arith.constant 0 : i32
    %c0_i32_0 = arith.constant 0 : i32
    %c0_i32_1 = arith.constant 0 : i32
    return %c0_i32, %c0_i32_0 : i32, i32
  }
  func.func @transform_2(%arg0: i32) -> (i32, i32) {
    %c0_i32 = arith.constant 0 : i32
    %c0_i32_0 = arith.constant 0 : i32
    %c0_i32_1 = arith.constant 0 : i32
    return %c0_i32, %c0_i32_0 : i32, i32
  }
  func.func @transform_3(%arg0: i32) -> (i32, i32, i32) {
    %c0_i32 = arith.constant 0 : i32
    %c0_i32_0 = arith.constant 0 : i32
    %c0_i32_1 = arith.constant 0 : i32
    return %arg0, %c0_i32, %c0_i32_0 : i32, i32, i32
  }
}

</mosaic_0001>

<llo_original>
// kernel: image_components_to_mask.1
$region0: #{image_components_to_mask.1}
  #allocation0 [shape = 'u32[]', space=smem, size = 0x4, offset = 0x4, fixed_abs, tag = 'smem constant byte address 0x4 - core index']
  #allocation1 [shape = 'u32[144,128]{1,0:T(1,128)}', space=vmem, size = 0x12000, scoped, tag = 'internal scratch']
  %s0 = inlined_call_operand.vmem [shape: bf16[1,128,216], index: 0, kind: input, shape index: {}]
  %s1 = inlined_call_operand.vmem [shape: bf16[400,96], index: 1, kind: input, shape index: {}]
  %s2 = inlined_call_operand.vmem [shape: f32[8,128], index: 2, kind: input, shape index: {}]
  %s3 = inlined_call_operand.vmem [shape: f32[1,2,64], index: 3, kind: output, shape index: {}]
  %s4 = sld [smem:[#allocation0]]
  $region22: #{image_components_to_mask.1} parent=0
    _
  %s6 = ssub.s32 1, %s4
  %s7 = scalar_select 0, %s6, %s4
  // Predicated region
  $region2: #{image_components_to_mask.1} parent=0 // pred_check
    _
  $region3: #{image_components_to_mask.1} parent=0 // pred_check_branch
    %9 = sbr.rel (0) target = $region5
  $region4: #{image_components_to_mask.1} parent=0 // pred_region
    _
  $region5: #{image_components_to_mask.1} parent=0 // pred_fallthru
    _
  // Predicated region
  $region6: #{image_components_to_mask.1} parent=0 // pred_check
    _
  $region7: #{image_components_to_mask.1} parent=0 // pred_check_branch
    %11 = sbr.rel (0) target = $region9
  $region8: #{image_components_to_mask.1} parent=0 // pred_region
    _
  $region9: #{image_components_to_mask.1} parent=0 // pred_fallthru
    _
  // Predicated region
  $region10: #{image_components_to_mask.1} parent=0 // pred_check
    _
  $region11: #{image_components_to_mask.1} parent=0 // pred_check_branch
    %13 = sbr.rel (0) target = $region13
  $region12: #{image_components_to_mask.1} parent=0 // pred_region
    _
  $region13: #{image_components_to_mask.1} parent=0 // pred_fallthru
    _
  %v15 = vld [vmem:[%s0] sm:$0xff]
  %v16 = vld [vmem:[%s0 + $0x8] sm:$0xff]
  %v17 = vld [vmem:[%s0 + $0x10] sm:$0xff]
  %v18 = vld [vmem:[%s0 + $0x18] sm:$0xff]
  %v19 = vld [vmem:[%s0 + $0x20] sm:$0xff]
  %v20 = vld [vmem:[%s0 + $0x28] sm:$0xff]
  %v21 = vld [vmem:[%s0 + $0x30] sm:$0xff]
  %v22 = vld [vmem:[%s0 + $0x38] sm:$0xff]
  %v23 = vld [vmem:[%s0 + $0x40] sm:$0xff]
  %v24 = vld [vmem:[%s0 + $0x48] sm:$0xff]
  %v25 = vld [vmem:[%s0 + $0x50] sm:$0xff]
  %v26 = vld [vmem:[%s0 + $0x58] sm:$0xff]
  %v27 = vld [vmem:[%s0 + $0x60] sm:$0xff]
  %v28 = vld [vmem:[%s0 + $0x68] sm:$0xff]
  %v29 = vld [vmem:[%s0 + $0x70] sm:$0xff]
  %v30 = vld [vmem:[%s0 + $0x78] sm:$0xff]
  %v31 = vld [vmem:[%s1] sm:$0xf]
  %v32 = vld [vmem:[%s1 + $0x4] sm:$0xf]
  %v33 = vld [vmem:[%s1 + $0x8] sm:$0xf]
  %v34 = vld [vmem:[%s1 + $0xc] sm:$0xf]
  %v35 = vld [vmem:[%s1 + $0x10] sm:$0xf]
  %v36 = vld [vmem:[%s1 + $0x14] sm:$0xf]
  %v37 = vld [vmem:[%s1 + $0x18] sm:$0xf]
  %v38 = vld [vmem:[%s1 + $0x1c] sm:$0xf]
  %v39 = vld [vmem:[%s1 + $0x20] sm:$0xf]
  %v40 = vld [vmem:[%s1 + $0x24] sm:$0xf]
  %v41 = vld [vmem:[%s1 + $0x28] sm:$0xf]
  %v42 = vld [vmem:[%s1 + $0x2c] sm:$0xf]
  %v43 = vld [vmem:[%s1 + $0x30] sm:$0xf]
  %v44 = vld [vmem:[%s1 + $0x34] sm:$0xf]
  %v45 = vld [vmem:[%s1 + $0x38] sm:$0xf]
  %v46 = vld [vmem:[%s1 + $0x3c] sm:$0xf]
  %v47 = vld [vmem:[%s1 + $0x40] sm:$0xf]
  %v48 = vld [vmem:[%s1 + $0x44] sm:$0xf]
  %v49 = vld [vmem:[%s1 + $0x48] sm:$0xf]
  %v50 = vld [vmem:[%s1 + $0x4c] sm:$0xf]
  %v51 = vld [vmem:[%s1 + $0x50] sm:$0xf]
  %v52 = vld [vmem:[%s1 + $0x54] sm:$0xf]
  %v53 = vld [vmem:[%s1 + $0x58] sm:$0xf]
  %v54 = vld [vmem:[%s1 + $0x5c] sm:$0xf]
  %v55 = vld [vmem:[%s1 + $0x60] sm:$0xf]
  %v56 = vld [vmem:[%s1 + $0x64] sm:$0xf]
  %v57 = vld [vmem:[%s1 + $0x68] sm:$0xf]
  %v58 = vld [vmem:[%s2] sm:$0x1]
  %v59 = vlaneseq
  %v60 = vshrl.u32 %v59, 7
  %v61 = vsub.s32 0, %v60
  %v62 = vrot.slane %v58, %v61
  %v79 = vunpack.c.l.b16 %v15
  %v80 = vunpack.c.h.b16 %v15
  %v81 = vunpack.c.l.b16 %v16
  %v82 = vunpack.c.h.b16 %v16
  %v83 = vunpack.c.l.b16 %v17
  %v84 = vunpack.c.h.b16 %v17
  %v85 = vunpack.c.l.b16 %v18
  %v86 = vunpack.c.h.b16 %v18
  %v87 = vunpack.c.l.b16 %v19
  %v88 = vunpack.c.h.b16 %v19
  %v89 = vunpack.c.l.b16 %v20
  %v90 = vunpack.c.h.b16 %v20
  %v91 = vunpack.c.l.b16 %v21
  %v92 = vunpack.c.h.b16 %v21
  %v93 = vunpack.c.l.b16 %v22
  %v94 = vunpack.c.h.b16 %v22
  %v95 = vunpack.c.l.b16 %v23
  %v96 = vunpack.c.h.b16 %v23
  %v97 = vunpack.c.l.b16 %v24
  %v98 = vunpack.c.h.b16 %v24
  %v99 = vunpack.c.l.b16 %v25
  %v100 = vunpack.c.h.b16 %v25
  %v101 = vunpack.c.l.b16 %v26
  %v102 = vunpack.c.h.b16 %v26
  %v103 = vunpack.c.l.b16 %v27
  %v104 = vunpack.c.h.b16 %v27
  %v105 = vunpack.c.l.b16 %v28
  %v106 = vunpack.c.h.b16 %v28
  %v107 = vunpack.c.l.b16 %v29
  %v108 = vunpack.c.h.b16 %v29
  %v109 = vunpack.c.l.b16 %v30
  %v110 = vunpack.c.h.b16 %v30
  %v111 = vpack.c.b16 %v81, %v79
  %v112 = vpack.c.b16 %v82, %v80
  %v113 = vpack.c.b16 %v85, %v83
  %v114 = vpack.c.b16 %v86, %v84
  %v115 = vpack.c.b16 %v89, %v87
  %v116 = vpack.c.b16 %v90, %v88
  %v117 = vpack.c.b16 %v93, %v91
  %v118 = vpack.c.b16 %v94, %v92
  %v119 = vpack.c.b16 %v97, %v95
  %v120 = vpack.c.b16 %v98, %v96
  %v121 = vpack.c.b16 %v101, %v99
  %v122 = vpack.c.b16 %v102, %v100
  %v123 = vpack.c.b16 %v105, %v103
  %v124 = vpack.c.b16 %v106, %v104
  %v125 = vpack.c.b16 %v109, %v107
  %v126 = vpack.c.b16 %v110, %v108
  %v162 = vunpack.c.l.b16 %v31
  %v163 = vunpack.c.l.b16 %v32
  %v164 = vunpack.c.l.b16 %v33
  %v165 = vunpack.c.l.b16 %v34
  %v166 = vunpack.c.l.b16 %v35
  %v167 = vunpack.c.l.b16 %v36
  %v168 = vunpack.c.l.b16 %v37
  %v169 = vunpack.c.l.b16 %v38
  %v170 = vunpack.c.l.b16 %v39
  %v171 = vunpack.c.l.b16 %v40
  %v172 = vunpack.c.l.b16 %v41
  %v173 = vunpack.c.l.b16 %v42
  %v174 = vunpack.c.l.b16 %v43
  %v175 = vunpack.c.l.b16 %v44
  %v176 = vunpack.c.l.b16 %v45
  %v177 = vunpack.c.l.b16 %v46
  %v178 = vunpack.c.l.b16 %v47
  %v179 = vunpack.c.l.b16 %v48
  %v180 = vunpack.c.l.b16 %v49
  %v181 = vunpack.c.l.b16 %v50
  %v182 = vunpack.c.l.b16 %v51
  %v183 = vunpack.c.l.b16 %v52
  %v184 = vunpack.c.l.b16 %v53
  %v185 = vunpack.c.l.b16 %v54
  %v186 = vunpack.c.l.b16 %v55
  %v187 = vunpack.c.l.b16 %v56
  %v188 = vunpack.c.l.b16 %v57
  %v189 = vpack.c.b16 %v163, %v162
  %v190 = vpack.c.b16 %v165, %v164
  %v191 = vpack.c.b16 %v167, %v166
  %v192 = vpack.c.b16 %v169, %v168
  %v193 = vpack.c.b16 %v171, %v170
  %v194 = vpack.c.b16 %v173, %v172
  %v195 = vpack.c.b16 %v175, %v174
  %v196 = vpack.c.b16 %v177, %v176
  %v197 = vpack.c.b16 %v179, %v178
  %v198 = vpack.c.b16 %v181, %v180
  %v199 = vpack.c.b16 %v183, %v182
  %v200 = vpack.c.b16 %v185, %v184
  %v201 = vpack.c.b16 %v187, %v186
  %v202 = vpack.c.b16 %v188, %v188
  %vm216 = vcmask 719872
  %v218 = vsel %vm216, %v112, 0
  %v221 = vsel %vm216, %v114, 0
  %v224 = vsel %vm216, %v116, 0
  %v227 = vsel %vm216, %v118, 0
  %v230 = vsel %vm216, %v120, 0
  %v233 = vsel %vm216, %v122, 0
  %v236 = vsel %vm216, %v124, 0
  %v239 = vsel %vm216, %v126, 0
  %vm241 = vcmask 1043456
  %v243 = vsel %vm241, %v202, 0
  %245 = vmatprep.subr.bf16.mxu0 0
  %246 = vmatpush1.bf16.msra.mxu0 %v189
  %247 = vmatprep.subr.bf16.mxu0 0
  %248 = vmatpush1.bf16.msra.mxu0 %v190
  %249 = vmatprep.subr.bf16.mxu0 0
  %250 = vmatpush1.bf16.msra.mxu0 %v191
  %251 = vmatprep.subr.bf16.mxu0 0
  %252 = vmatpush1.bf16.msra.mxu0 %v192
  %253 = vmatprep.subr.bf16.mxu0 0
  %254 = vmatpush1.bf16.msra.mxu0 %v193
  %255 = vmatprep.subr.bf16.mxu0 0
  %256 = vmatpush1.bf16.msra.mxu0 %v194
  %257 = vmatprep.subr.bf16.mxu0 0
  %258 = vmatpush1.bf16.msra.mxu0 %v195
  %259 = vmatprep.subr.bf16.mxu0 0
  %260 = vmatpush1.bf16.msra.mxu0 %v196
  %261 = vmatprep.subr.bf16.mxu0 0
  %262 = vmatpush1.bf16.msra.mxu0 %v197
  %263 = vmatprep.subr.bf16.mxu0 0
  %264 = vmatpush1.bf16.msra.mxu0 %v198
  %265 = vmatprep.subr.bf16.mxu0 0
  %266 = vmatpush1.bf16.msra.mxu0 %v199
  %267 = vmatprep.subr.bf16.mxu0 0
  %268 = vmatpush1.bf16.msra.mxu0 %v200
  %269 = vmatprep.subr.bf16.mxu0 0
  %270 = vmatpush1.bf16.msra.mxu0 %v201
  %271 = vmatprep.subr.bf16.mxu0 0
  %272 = vmatpush1.bf16.msra.mxu0 %v243
  %273 = vmatprep.subr.bf16.mxu0 0
  %274 = vmatpush1.bf16.msra.mxu0 0
  %275 = vmatprep.subr.bf16.mxu0 0
  %276 = vmatpush1.bf16.msra.mxu0 0
  %277 = vmatprep.mubr.bf16.mxu0 %v218
  %278 = vmatmul.mubr.bf16.gmra.mrb[0].mxu0 %v111
  %v279 = vpop.f32.mrb[0].mxu0
  %v280 = vadd.f32 %v62, %v279
  %v281 = vpop.f32.mrb[0].mxu0
  %v282 = vpop.f32.mrb[0].mxu0
  %v283 = vadd.f32 %v62, %v282
  %v284 = vpop.f32.mrb[0].mxu0
  %285 = vmatprep.mubr.bf16.mxu0 %v221
  %286 = vmatmul.mubr.bf16.gmra.mrb[0].mxu0 %v113
  %v287 = vpop.f32.mrb[0].mxu0
  %v288 = vadd.f32 %v62, %v287
  %v289 = vpop.f32.mrb[0].mxu0
  %v290 = vpop.f32.mrb[0].mxu0
  %v291 = vadd.f32 %v62, %v290
  %v292 = vpop.f32.mrb[0].mxu0
  %293 = vmatprep.mubr.bf16.mxu0 %v224
  %294 = vmatmul.mubr.bf16.gmra.mrb[0].mxu0 %v115
  %v295 = vpop.f32.mrb[0].mxu0
  %v296 = vadd.f32 %v62, %v295
  %v297 = vpop.f32.mrb[0].mxu0
  %v298 = vpop.f32.mrb[0].mxu0
  %v299 = vadd.f32 %v62, %v298
  %v300 = vpop.f32.mrb[0].mxu0
  %301 = vmatprep.mubr.bf16.mxu0 %v227
  %302 = vmatmul.mubr.bf16.gmra.mrb[0].mxu0 %v117
  %v303 = vpop.f32.mrb[0].mxu0
  %v304 = vadd.f32 %v62, %v303
  %v305 = vpop.f32.mrb[0].mxu0
  %v306 = vpop.f32.mrb[0].mxu0
  %v307 = vadd.f32 %v62, %v306
  %v308 = vpop.f32.mrb[0].mxu0
  %309 = vmatprep.mubr.bf16.mxu0 %v230
  %310 = vmatmul.mubr.bf16.gmra.mrb[0].mxu0 %v119
  %v311 = vpop.f32.mrb[0].mxu0
  %v312 = vadd.f32 %v62, %v311
  %v313 = vpop.f32.mrb[0].mxu0
  %v314 = vpop.f32.mrb[0].mxu0
  %v315 = vadd.f32 %v62, %v314
  %v316 = vpop.f32.mrb[0].mxu0
  %317 = vmatprep.mubr.bf16.mxu0 %v233
  %318 = vmatmul.mubr.bf16.gmra.mrb[0].mxu0 %v121
  %v319 = vpop.f32.mrb[0].mxu0
  %v320 = vadd.f32 %v62, %v319
  %v321 = vpop.f32.mrb[0].mxu0
  %v322 = vpop.f32.mrb[0].mxu0
  %v323 = vadd.f32 %v62, %v322
  %v324 = vpop.f32.mrb[0].mxu0
  %325 = vmatprep.mubr.bf16.mxu0 %v236
  %326 = vmatmul.mubr.bf16.gmra.mrb[0].mxu0 %v123
  %v327 = vpop.f32.mrb[0].mxu0
  %v328 = vadd.f32 %v62, %v327
  %v329 = vpop.f32.mrb[0].mxu0
  %v330 = vpop.f32.mrb[0].mxu0
  %v331 = vadd.f32 %v62, %v330
  %v332 = vpop.f32.mrb[0].mxu0
  %333 = vmatprep.mubr.bf16.mxu0 %v239
  %334 = vmatmul.mubr.bf16.gmra.mrb[0].mxu0 %v125
  %v335 = vpop.f32.mrb[0].mxu0
  %v336 = vadd.f32 %v62, %v335
  %v337 = vpop.f32.mrb[0].mxu0
  %v338 = vpop.f32.mrb[0].mxu0
  %v339 = vadd.f32 %v62, %v338
  %v340 = vpop.f32.mrb[0].mxu0
  %341 = vdwg.mxu0
  %v342 = vmax.f32 %v280, 0.0
  %v343 = vmax.f32 %v283, 0.0
  %v344 = vmax.f32 %v288, 0.0
  %v345 = vmax.f32 %v291, 0.0
  %v346 = vmax.f32 %v296, 0.0
  %v347 = vmax.f32 %v299, 0.0
  %v348 = vmax.f32 %v304, 0.0
  %v349 = vmax.f32 %v307, 0.0
  %v350 = vmax.f32 %v312, 0.0
  %v351 = vmax.f32 %v315, 0.0
  %v352 = vmax.f32 %v320, 0.0
  %v353 = vmax.f32 %v323, 0.0
  %v354 = vmax.f32 %v328, 0.0
  %v355 = vmax.f32 %v331, 0.0
  %v356 = vmax.f32 %v336, 0.0
  %v357 = vmax.f32 %v339, 0.0
  %v358 = vpack.c.bf16 %v343, %v342
  %v359 = vpack.c.bf16 %v345, %v344
  %v360 = vpack.c.bf16 %v347, %v346
  %v361 = vpack.c.bf16 %v349, %v348
  %v362 = vpack.c.bf16 %v351, %v350
  %v363 = vpack.c.bf16 %v353, %v352
  %v364 = vpack.c.bf16 %v355, %v354
  %v365 = vpack.c.bf16 %v357, %v356
  %v366 = vld [vmem:[%s1 + $0x70] sm:$0xf]
  %v367 = vld [vmem:[%s1 + $0x74] sm:$0xf]
  %v368 = vld [vmem:[%s1 + $0x78] sm:$0xf]
  %v369 = vld [vmem:[%s2 + $0x1] sm:$0x1]
  %v370 = vlaneseq
  %v371 = vshrl.u32 %v370, 7
  %v372 = vsub.s32 0, %v371
  %v373 = vrot.slane %v369, %v372
  %v377 = vunpack.c.l.b16 %v366
  %v378 = vunpack.c.l.b16 %v367
  %v379 = vunpack.c.l.b16 %v368
  %v380 = vpack.c.b16 %v378, %v377
  %v381 = vpack.c.b16 %v379, %v379
  %vm383 = vcmask 195584
  %v385 = vsel %vm383, %v358, 0
  %v388 = vsel %vm383, %v359, 0
  %v391 = vsel %vm383, %v360, 0
  %v394 = vsel %vm383, %v361, 0
  %v397 = vsel %vm383, %v362, 0
  %v400 = vsel %vm383, %v363, 0
  %v403 = vsel %vm383, %v364, 0
  %v406 = vsel %vm383, %v365, 0
  %v409 = vsel %vm241, %v381, 0
  %411 = vmatprep.subr.bf16.mxu0 0
  %412 = vmatpush1.bf16.msra.mxu0 %v380
  %413 = vmatprep.subr.bf16.mxu0 0
  %414 = vmatpush1.bf16.msra.mxu0 %v409
  %415 = vmatprep.subr.bf16.mxu0 0
  %416 = vmatpush1.bf16.msra.mxu0 0
  %417 = vmatprep.subr.bf16.mxu0 0
  %418 = vmatpush1.bf16.msra.mxu0 0
  %419 = vmatprep.subr.bf16.mxu0 0
  %420 = vmatpush1.bf16.msra.mxu0 0
  %421 = vmatprep.subr.bf16.mxu0 0
  %422 = vmatpush1.bf16.msra.mxu0 0
  %423 = vmatprep.subr.bf16.mxu0 0
  %424 = vmatpush1.bf16.msra.mxu0 0
  %425 = vmatprep.subr.bf16.mxu0 0
  %426 = vmatpush1.bf16.msra.mxu0 0
  %427 = vmatprep.subr.bf16.mxu0 0
  %428 = vmatpush1.bf16.msra.mxu0 0
  %429 = vmatprep.subr.bf16.mxu0 0
  %430 = vmatpush1.bf16.msra.mxu0 0
  %431 = vmatprep.subr.bf16.mxu0 0
  %432 = vmatpush1.bf16.msra.mxu0 0
  %433 = vmatprep.subr.bf16.mxu0 0
  %434 = vmatpush1.bf16.msra.mxu0 0
  %435 = vmatprep.subr.bf16.mxu0 0
  %436 = vmatpush1.bf16.msra.mxu0 0
  %437 = vmatprep.subr.bf16.mxu0 0
  %438 = vmatpush1.bf16.msra.mxu0 0
  %439 = vmatprep.subr.bf16.mxu0 0
  %440 = vmatpush1.bf16.msra.mxu0 0
  %441 = vmatprep.subr.bf16.mxu0 0
  %442 = vmatpush1.bf16.msra.mxu0 0
  %443 = vmatprep.mubr.bf16.mxu0 0
  %444 = vmatmul.mubr.bf16.gmra.mrb[0].mxu0 %v385
  %v445 = vpop.f32.mrb[0].mxu0
  %v446 = vadd.f32 %v373, %v445
  %v447 = vpop.f32.mrb[0].mxu0
  %v448 = vpop.f32.mrb[0].mxu0
  %v449 = vadd.f32 %v373, %v448
  %v450 = vpop.f32.mrb[0].mxu0
  %451 = vmatprep.mubr.bf16.mxu0 0
  %452 = vmatmul.mubr.bf16.gmra.mrb[0].mxu0 %v388
  %v453 = vpop.f32.mrb[0].mxu0
  %v454 = vadd.f32 %v373, %v453
  %v455 = vpop.f32.mrb[0].mxu0
  %v456 = vpop.f32.mrb[0].mxu0
  %v457 = vadd.f32 %v373, %v456
  %v458 = vpop.f32.mrb[0].mxu0
  %459 = vmatprep.mubr.bf16.mxu0 0
  %460 = vmatmul.mubr.bf16.gmra.mrb[0].mxu0 %v391
  %v461 = vpop.f32.mrb[0].mxu0
  %v462 = vadd.f32 %v373, %v461
  %v463 = vpop.f32.mrb[0].mxu0
  %v464 = vpop.f32.mrb[0].mxu0
  %v465 = vadd.f32 %v373, %v464
  %v466 = vpop.f32.mrb[0].mxu0
  %467 = vmatprep.mubr.bf16.mxu0 0
  %468 = vmatmul.mubr.bf16.gmra.mrb[0].mxu0 %v394
  %v469 = vpop.f32.mrb[0].mxu0
  %v470 = vadd.f32 %v373, %v469
  %v471 = vpop.f32.mrb[0].mxu0
  %v472 = vpop.f32.mrb[0].mxu0
  %v473 = vadd.f32 %v373, %v472
  %v474 = vpop.f32.mrb[0].mxu0
  %475 = vmatprep.mubr.bf16.mxu0 0
  %476 = vmatmul.mubr.bf16.gmra.mrb[0].mxu0 %v397
  %v477 = vpop.f32.mrb[0].mxu0
  %v478 = vadd.f32 %v373, %v477
  %v479 = vpop.f32.mrb[0].mxu0
  %v480 = vpop.f32.mrb[0].mxu0
  %v481 = vadd.f32 %v373, %v480
  %v482 = vpop.f32.mrb[0].mxu0
  %483 = vmatprep.mubr.bf16.mxu0 0
  %484 = vmatmul.mubr.bf16.gmra.mrb[0].mxu0 %v400
  %v485 = vpop.f32.mrb[0].mxu0
  %v486 = vadd.f32 %v373, %v485
  %v487 = vpop.f32.mrb[0].mxu0
  %v488 = vpop.f32.mrb[0].mxu0
  %v489 = vadd.f32 %v373, %v488
  %v490 = vpop.f32.mrb[0].mxu0
  %491 = vmatprep.mubr.bf16.mxu0 0
  %492 = vmatmul.mubr.bf16.gmra.mrb[0].mxu0 %v403
  %v493 = vpop.f32.mrb[0].mxu0
  %v494 = vadd.f32 %v373, %v493
  %v495 = vpop.f32.mrb[0].mxu0
  %v496 = vpop.f32.mrb[0].mxu0
  %v497 = vadd.f32 %v373, %v496
  %v498 = vpop.f32.mrb[0].mxu0
  %499 = vmatprep.mubr.bf16.mxu0 0
  %500 = vmatmul.mubr.bf16.gmra.mrb[0].mxu0 %v406
  %v501 = vpop.f32.mrb[0].mxu0
  %v502 = vadd.f32 %v373, %v501
  %v503 = vpop.f32.mrb[0].mxu0
  %v504 = vpop.f32.mrb[0].mxu0
  %v505 = vadd.f32 %v373, %v504
  %v506 = vpop.f32.mrb[0].mxu0
  %507 = vdwg.mxu0
  %v508 = vmax.f32 %v446, 0.0
  %v509 = vmax.f32 %v449, 0.0
  %v510 = vmax.f32 %v454, 0.0
  %v511 = vmax.f32 %v457, 0.0
  %v512 = vmax.f32 %v462, 0.0
  %v513 = vmax.f32 %v465, 0.0
  %v514 = vmax.f32 %v470, 0.0
  %v515 = vmax.f32 %v473, 0.0
  %v516 = vmax.f32 %v478, 0.0
  %v517 = vmax.f32 %v481, 0.0
  %v518 = vmax.f32 %v486, 0.0
  %v519 = vmax.f32 %v489, 0.0
  %v520 = vmax.f32 %v494, 0.0
  %v521 = vmax.f32 %v497, 0.0
  %v522 = vmax.f32 %v502, 0.0
  %v523 = vmax.f32 %v505, 0.0
  %v524 = vpack.c.bf16 %v509, %v508
  %v525 = vpack.c.bf16 %v511, %v510
  %v526 = vpack.c.bf16 %v513, %v512
  %v527 = vpack.c.bf16 %v515, %v514
  %v528 = vpack.c.bf16 %v517, %v516
  %v529 = vpack.c.bf16 %v519, %v518
  %v530 = vpack.c.bf16 %v521, %v520
  %v531 = vpack.c.bf16 %v523, %v522
  %v532 = vld [vmem:[%s1 + $0x80] sm:$0xf]
  %v533 = vld [vmem:[%s1 + $0x84] sm:$0xf]
  %v534 = vld [vmem:[%s1 + $0x88] sm:$0xf]
  %v535 = vld [vmem:[%s1 + $0x8c] sm:$0xf]
  %v536 = vld [vmem:[%s1 + $0x90] sm:$0xf]
  %v537 = vld [vmem:[%s1 + $0x94] sm:$0xf]
  %v538 = vld [vmem:[%s2 + $0x2] sm:$0x1]
  %v539 = vlaneseq
  %v540 = vshrl.u32 %v539, 7
  %v541 = vsub.s32 0, %v540
  %v542 = vrot.slane %v538, %v541
  %v549 = vunpack.c.l.b16 %v532
  %v550 = vunpack.c.l.b16 %v533
  %v551 = vunpack.c.l.b16 %v534
  %v552 = vunpack.c.l.b16 %v535
  %v553 = vunpack.c.l.b16 %v536
  %v554 = vunpack.c.l.b16 %v537
  %v555 = vpack.c.b16 %v550, %v549
  %v556 = vpack.c.b16 %v552, %v551
  %v557 = vpack.c.b16 %v554, %v553
  %vm561 = vcmask 392192
  %v563 = vsel %vm561, %v524, 0
  %v566 = vsel %vm561, %v525, 0
  %v569 = vsel %vm561, %v526, 0
  %v572 = vsel %vm561, %v527, 0
  %v575 = vsel %vm561, %v528, 0
  %v578 = vsel %vm561, %v529, 0
  %v581 = vsel %vm561, %v530, 0
  %v584 = vsel %vm561, %v531, 0
  %586 = vmatprep.subr.bf16.mxu0 0
  %587 = vmatpush1.bf16.msra.mxu0 %v555
  %588 = vmatprep.subr.bf16.mxu0 0
  %589 = vmatpush1.bf16.msra.mxu0 %v556
  %590 = vmatprep.subr.bf16.mxu0 0
  %591 = vmatpush1.bf16.msra.mxu0 %v557
  %592 = vmatprep.subr.bf16.mxu0 0
  %593 = vmatpush1.bf16.msra.mxu0 0
  %594 = vmatprep.subr.bf16.mxu0 0
  %595 = vmatpush1.bf16.msra.mxu0 0
  %596 = vmatprep.subr.bf16.mxu0 0
  %597 = vmatpush1.bf16.msra.mxu0 0
  %598 = vmatprep.subr.bf16.mxu0 0
  %599 = vmatpush1.bf16.msra.mxu0 0
  %600 = vmatprep.subr.bf16.mxu0 0
  %601 = vmatpush1.bf16.msra.mxu0 0
  %602 = vmatprep.subr.bf16.mxu0 0
  %603 = vmatpush1.bf16.msra.mxu0 0
  %604 = vmatprep.subr.bf16.mxu0 0
  %605 = vmatpush1.bf16.msra.mxu0 0
  %606 = vmatprep.subr.bf16.mxu0 0
  %607 = vmatpush1.bf16.msra.mxu0 0
  %608 = vmatprep.subr.bf16.mxu0 0
  %609 = vmatpush1.bf16.msra.mxu0 0
  %610 = vmatprep.subr.bf16.mxu0 0
  %611 = vmatpush1.bf16.msra.mxu0 0
  %612 = vmatprep.subr.bf16.mxu0 0
  %613 = vmatpush1.bf16.msra.mxu0 0
  %614 = vmatprep.subr.bf16.mxu0 0
  %615 = vmatpush1.bf16.msra.mxu0 0
  %616 = vmatprep.subr.bf16.mxu0 0
  %617 = vmatpush1.bf16.msra.mxu0 0
  %618 = vmatprep.mubr.bf16.mxu0 0
  %619 = vmatmul.mubr.bf16.gmra.mrb[0].mxu0 %v563
  %v620 = vpop.f32.mrb[0].mxu0
  %v621 = vadd.f32 %v542, %v620
  %v622 = vpop.f32.mrb[0].mxu0
  %v623 = vpop.f32.mrb[0].mxu0
  %v624 = vadd.f32 %v542, %v623
  %v625 = vpop.f32.mrb[0].mxu0
  %626 = vmatprep.mubr.bf16.mxu0 0
  %627 = vmatmul.mubr.bf16.gmra.mrb[0].mxu0 %v566
  %v628 = vpop.f32.mrb[0].mxu0
  %v629 = vadd.f32 %v542, %v628
  %v630 = vpop.f32.mrb[0].mxu0
  %v631 = vpop.f32.mrb[0].mxu0
  %v632 = vadd.f32 %v542, %v631
  %v633 = vpop.f32.mrb[0].mxu0
  %634 = vmatprep.mubr.bf16.mxu0 0
  %635 = vmatmul.mubr.bf16.gmra.mrb[0].mxu0 %v569
  %v636 = vpop.f32.mrb[0].mxu0
  %v637 = vadd.f32 %v542, %v636
  %v638 = vpop.f32.mrb[0].mxu0
  %v639 = vpop.f32.mrb[0].mxu0
  %v640 = vadd.f32 %v542, %v639
  %v641 = vpop.f32.mrb[0].mxu0
  %642 = vmatprep.mubr.bf16.mxu0 0
  %643 = vmatmul.mubr.bf16.gmra.mrb[0].mxu0 %v572
  %v644 = vpop.f32.mrb[0].mxu0
  %v645 = vadd.f32 %v542, %v644
  %v646 = vpop.f32.mrb[0].mxu0
  %v647 = vpop.f32.mrb[0].mxu0
  %v648 = vadd.f32 %v542, %v647
  %v649 = vpop.f32.mrb[0].mxu0
  %650 = vmatprep.mubr.bf16.mxu0 0
  %651 = vmatmul.mubr.bf16.gmra.mrb[0].mxu0 %v575
  %v652 = vpop.f32.mrb[0].mxu0
  %v653 = vadd.f32 %v542, %v652
  %v654 = vpop.f32.mrb[0].mxu0
  %v655 = vpop.f32.mrb[0].mxu0
  %v656 = vadd.f32 %v542, %v655
  %v657 = vpop.f32.mrb[0].mxu0
  %658 = vmatprep.mubr.bf16.mxu0 0
  %659 = vmatmul.mubr.bf16.gmra.mrb[0].mxu0 %v578
  %v660 = vpop.f32.mrb[0].mxu0
  %v661 = vadd.f32 %v542, %v660
  %v662 = vpop.f32.mrb[0].mxu0
  %v663 = vpop.f32.mrb[0].mxu0
  %v664 = vadd.f32 %v542, %v663
  %v665 = vpop.f32.mrb[0].mxu0
  %666 = vmatprep.mubr.bf16.mxu0 0
  %667 = vmatmul.mubr.bf16.gmra.mrb[0].mxu0 %v581
  %v668 = vpop.f32.mrb[0].mxu0
  %v669 = vadd.f32 %v542, %v668
  %v670 = vpop.f32.mrb[0].mxu0
  %v671 = vpop.f32.mrb[0].mxu0
  %v672 = vadd.f32 %v542, %v671
  %v673 = vpop.f32.mrb[0].mxu0
  %674 = vmatprep.mubr.bf16.mxu0 0
  %675 = vmatmul.mubr.bf16.gmra.mrb[0].mxu0 %v584
  %v676 = vpop.f32.mrb[0].mxu0
  %v677 = vadd.f32 %v542, %v676
  %v678 = vpop.f32.mrb[0].mxu0
  %v679 = vpop.f32.mrb[0].mxu0
  %v680 = vadd.f32 %v542, %v679
  %v681 = vpop.f32.mrb[0].mxu0
  %682 = vdwg.mxu0
  %699 = vrot.lane.b32.xlu0 %v446, 80
  %v700 = vpop.permute.xlu0 %699
  %701 = vrot.lane.b32.xlu0 %v449, 80
  %v702 = vpop.permute.xlu0 %701
  %703 = vrot.lane.b32.xlu0 %v454, 80
  %v704 = vpop.permute.xlu0 %703
  %705 = vrot.lane.b32.xlu0 %v457, 80
  %v706 = vpop.permute.xlu0 %705
  %707 = vrot.lane.b32.xlu0 %v462, 80
  %v708 = vpop.permute.xlu0 %707
  %709 = vrot.lane.b32.xlu0 %v465, 80
  %v710 = vpop.permute.xlu0 %709
  %711 = vrot.lane.b32.xlu0 %v470, 80
  %v712 = vpop.permute.xlu0 %711
  %713 = vrot.lane.b32.xlu0 %v473, 80
  %v714 = vpop.permute.xlu0 %713
  %715 = vrot.lane.b32.xlu0 %v478, 80
  %v716 = vpop.permute.xlu0 %715
  %717 = vrot.lane.b32.xlu0 %v481, 80
  %v718 = vpop.permute.xlu0 %717
  %719 = vrot.lane.b32.xlu0 %v486, 80
  %v720 = vpop.permute.xlu0 %719
  %721 = vrot.lane.b32.xlu0 %v489, 80
  %v722 = vpop.permute.xlu0 %721
  %723 = vrot.lane.b32.xlu0 %v494, 80
  %v724 = vpop.permute.xlu0 %723
  %725 = vrot.lane.b32.xlu0 %v497, 80
  %v726 = vpop.permute.xlu0 %725
  %727 = vrot.lane.b32.xlu0 %v502, 80
  %v728 = vpop.permute.xlu0 %727
  %729 = vrot.lane.b32.xlu0 %v505, 80
  %v730 = vpop.permute.xlu0 %729
  %v747 = vadd.f32 %v621, %v700
  %v748 = vadd.f32 %v624, %v702
  %v749 = vadd.f32 %v629, %v704
  %v750 = vadd.f32 %v632, %v706
  %v751 = vadd.f32 %v637, %v708
  %v752 = vadd.f32 %v640, %v710
  %v753 = vadd.f32 %v645, %v712
  %v754 = vadd.f32 %v648, %v714
  %v755 = vadd.f32 %v653, %v716
  %v756 = vadd.f32 %v656, %v718
  %v757 = vadd.f32 %v661, %v720
  %v758 = vadd.f32 %v664, %v722
  %v759 = vadd.f32 %v669, %v724
  %v760 = vadd.f32 %v672, %v726
  %v761 = vadd.f32 %v677, %v728
  %v762 = vadd.f32 %v680, %v730
  %v763 = vmax.f32 %v747, 0.0
  %v764 = vmax.f32 %v748, 0.0
  %v765 = vmax.f32 %v749, 0.0
  %v766 = vmax.f32 %v750, 0.0
  %v767 = vmax.f32 %v751, 0.0
  %v768 = vmax.f32 %v752, 0.0
  %v769 = vmax.f32 %v753, 0.0
  %v770 = vmax.f32 %v754, 0.0
  %v771 = vmax.f32 %v755, 0.0
  %v772 = vmax.f32 %v756, 0.0
  %v773 = vmax.f32 %v757, 0.0
  %v774 = vmax.f32 %v758, 0.0
  %v775 = vmax.f32 %v759, 0.0
  %v776 = vmax.f32 %v760, 0.0
  %v777 = vmax.f32 %v761, 0.0
  %v778 = vmax.f32 %v762, 0.0
  %v779 = vpack.c.bf16 %v764, %v763
  %v780 = vpack.c.bf16 %v766, %v765
  %v781 = vpack.c.bf16 %v768, %v767
  %v782 = vpack.c.bf16 %v770, %v769
  %v783 = vpack.c.bf16 %v772, %v771
  %v784 = vpack.c.bf16 %v774, %v773
  %v785 = vpack.c.bf16 %v776, %v775
  %v786 = vpack.c.bf16 %v778, %v777
  %v787 = vld [vmem:[%s1 + $0x98] sm:$0xf]
  %v788 = vld [vmem:[%s1 + $0x9c] sm:$0xf]
  %v789 = vld [vmem:[%s1 + $0xa0] sm:$0xf]
  %v790 = vld [vmem:[%s1 + $0xa4] sm:$0xf]
  %v791 = vld [vmem:[%s1 + $0xa8] sm:$0xf]
  %v792 = vld [vmem:[%s1 + $0xac] sm:$0xf]
  %v793 = vld [vmem:[%s2 + $0x3] sm:$0x1]
  %v794 = vlaneseq
  %v795 = vshrl.u32 %v794, 7
  %v796 = vsub.s32 0, %v795
  %v797 = vrot.slane %v793, %v796
  %v804 = vunpack.c.l.b16 %v787
  %v805 = vunpack.c.l.b16 %v788
  %v806 = vunpack.c.l.b16 %v789
  %v807 = vunpack.c.l.b16 %v790
  %v808 = vunpack.c.l.b16 %v791
  %v809 = vunpack.c.l.b16 %v792
  %v810 = vpack.c.b16 %v805, %v804
  %v811 = vpack.c.b16 %v807, %v806
  %v812 = vpack.c.b16 %v809, %v808
  %v817 = vsel %vm561, %v779, 0
  %v820 = vsel %vm561, %v780, 0
  %v823 = vsel %vm561, %v781, 0
  %v826 = vsel %vm561, %v782, 0
  %v829 = vsel %vm561, %v783, 0
  %v832 = vsel %vm561, %v784, 0
  %v835 = vsel %vm561, %v785, 0
  %v838 = vsel %vm561, %v786, 0
  %840 = vmatprep.subr.bf16.mxu0 0
  %841 = vmatpush1.bf16.msra.mxu0 %v810
  %842 = vmatprep.subr.bf16.mxu0 0
  %843 = vmatpush1.bf16.msra.mxu0 %v811
  %844 = vmatprep.subr.bf16.mxu0 0
  %845 = vmatpush1.bf16.msra.mxu0 %v812
  %846 = vmatprep.subr.bf16.mxu0 0
  %847 = vmatpush1.bf16.msra.mxu0 0
  %848 = vmatprep.subr.bf16.mxu0 0
  %849 = vmatpush1.bf16.msra.mxu0 0
  %850 = vmatprep.subr.bf16.mxu0 0
  %851 = vmatpush1.bf16.msra.mxu0 0
  %852 = vmatprep.subr.bf16.mxu0 0
  %853 = vmatpush1.bf16.msra.mxu0 0
  %854 = vmatprep.subr.bf16.mxu0 0
  %855 = vmatpush1.bf16.msra.mxu0 0
  %856 = vmatprep.subr.bf16.mxu0 0
  %857 = vmatpush1.bf16.msra.mxu0 0
  %858 = vmatprep.subr.bf16.mxu0 0
  %859 = vmatpush1.bf16.msra.mxu0 0
  %860 = vmatprep.subr.bf16.mxu0 0
  %861 = vmatpush1.bf16.msra.mxu0 0
  %862 = vmatprep.subr.bf16.mxu0 0
  %863 = vmatpush1.bf16.msra.mxu0 0
  %864 = vmatprep.subr.bf16.mxu0 0
  %865 = vmatpush1.bf16.msra.mxu0 0
  %866 = vmatprep.subr.bf16.mxu0 0
  %867 = vmatpush1.bf16.msra.mxu0 0
  %868 = vmatprep.subr.bf16.mxu0 0
  %869 = vmatpush1.bf16.msra.mxu0 0
  %870 = vmatprep.subr.bf16.mxu0 0
  %871 = vmatpush1.bf16.msra.mxu0 0
  %872 = vmatprep.mubr.bf16.mxu0 0
  %873 = vmatmul.mubr.bf16.gmra.mrb[0].mxu0 %v817
  %v874 = vpop.f32.mrb[0].mxu0
  %v875 = vadd.f32 %v797, %v874
  %v876 = vpop.f32.mrb[0].mxu0
  %v877 = vpop.f32.mrb[0].mxu0
  %v878 = vadd.f32 %v797, %v877
  %v879 = vpop.f32.mrb[0].mxu0
  %880 = vmatprep.mubr.bf16.mxu0 0
  %881 = vmatmul.mubr.bf16.gmra.mrb[0].mxu0 %v820
  %v882 = vpop.f32.mrb[0].mxu0
  %v883 = vadd.f32 %v797, %v882
  %v884 = vpop.f32.mrb[0].mxu0
  %v885 = vpop.f32.mrb[0].mxu0
  %v886 = vadd.f32 %v797, %v885
  %v887 = vpop.f32.mrb[0].mxu0
  %888 = vmatprep.mubr.bf16.mxu0 0
  %889 = vmatmul.mubr.bf16.gmra.mrb[0].mxu0 %v823
  %v890 = vpop.f32.mrb[0].mxu0
  %v891 = vadd.f32 %v797, %v890
  %v892 = vpop.f32.mrb[0].mxu0
  %v893 = vpop.f32.mrb[0].mxu0
  %v894 = vadd.f32 %v797, %v893
  %v895 = vpop.f32.mrb[0].mxu0
  %896 = vmatprep.mubr.bf16.mxu0 0
  %897 = vmatmul.mubr.bf16.gmra.mrb[0].mxu0 %v826
  %v898 = vpop.f32.mrb[0].mxu0
  %v899 = vadd.f32 %v797, %v898
  %v900 = vpop.f32.mrb[0].mxu0
  %v901 = vpop.f32.mrb[0].mxu0
  %v902 = vadd.f32 %v797, %v901
  %v903 = vpop.f32.mrb[0].mxu0
  %904 = vmatprep.mubr.bf16.mxu0 0
  %905 = vmatmul.mubr.bf16.gmra.mrb[0].mxu0 %v829
  %v906 = vpop.f32.mrb[0].mxu0
  %v907 = vadd.f32 %v797, %v906
  %v908 = vpop.f32.mrb[0].mxu0
  %v909 = vpop.f32.mrb[0].mxu0
  %v910 = vadd.f32 %v797, %v909
  %v911 = vpop.f32.mrb[0].mxu0
  %912 = vmatprep.mubr.bf16.mxu0 0
  %913 = vmatmul.mubr.bf16.gmra.mrb[0].mxu0 %v832
  %v914 = vpop.f32.mrb[0].mxu0
  %v915 = vadd.f32 %v797, %v914
  %v916 = vpop.f32.mrb[0].mxu0
  %v917 = vpop.f32.mrb[0].mxu0
  %v918 = vadd.f32 %v797, %v917
  %v919 = vpop.f32.mrb[0].mxu0
  %920 = vmatprep.mubr.bf16.mxu0 0
  %921 = vmatmul.mubr.bf16.gmra.mrb[0].mxu0 %v835
  %v922 = vpop.f32.mrb[0].mxu0
  %v923 = vadd.f32 %v797, %v922
  %v924 = vpop.f32.mrb[0].mxu0
  %v925 = vpop.f32.mrb[0].mxu0
  %v926 = vadd.f32 %v797, %v925
  %v927 = vpop.f32.mrb[0].mxu0
  %928 = vmatprep.mubr.bf16.mxu0 0
  %929 = vmatmul.mubr.bf16.gmra.mrb[0].mxu0 %v838
  %v930 = vpop.f32.mrb[0].mxu0
  %v931 = vadd.f32 %v797, %v930
  %v932 = vpop.f32.mrb[0].mxu0
  %v933 = vpop.f32.mrb[0].mxu0
  %v934 = vadd.f32 %v797, %v933
  %v935 = vpop.f32.mrb[0].mxu0
  %936 = vdwg.mxu0
  %v937 = vmax.f32 %v875, 0.0
  %v938 = vmax.f32 %v878, 0.0
  %v939 = vmax.f32 %v883, 0.0
  %v940 = vmax.f32 %v886, 0.0
  %v941 = vmax.f32 %v891, 0.0
  %v942 = vmax.f32 %v894, 0.0
  %v943 = vmax.f32 %v899, 0.0
  %v944 = vmax.f32 %v902, 0.0
  %v945 = vmax.f32 %v907, 0.0
  %v946 = vmax.f32 %v910, 0.0
  %v947 = vmax.f32 %v915, 0.0
  %v948 = vmax.f32 %v918, 0.0
  %v949 = vmax.f32 %v923, 0.0
  %v950 = vmax.f32 %v926, 0.0
  %v951 = vmax.f32 %v931, 0.0
  %v952 = vmax.f32 %v934, 0.0
  %v953 = vpack.c.bf16 %v938, %v937
  %v954 = vpack.c.bf16 %v940, %v939
  %v955 = vpack.c.bf16 %v942, %v941
  %v956 = vpack.c.bf16 %v944, %v943
  %v957 = vpack.c.bf16 %v946, %v945
  %v958 = vpack.c.bf16 %v948, %v947
  %v959 = vpack.c.bf16 %v950, %v949
  %v960 = vpack.c.bf16 %v952, %v951
  %v961 = vld [vmem:[%s1 + $0xb0] sm:$0xf]
  %v962 = vld [vmem:[%s1 + $0xb4] sm:$0xf]
  %v963 = vld [vmem:[%s1 + $0xb8] sm:$0xf]
  %v964 = vld [vmem:[%s1 + $0xbc] sm:$0xf]
  %v965 = vld [vmem:[%s1 + $0xc0] sm:$0xf]
  %v966 = vld [vmem:[%s1 + $0xc4] sm:$0xf]
  %v967 = vld [vmem:[%s2 + $0x4] sm:$0x1]
  %v968 = vlaneseq
  %v969 = vshrl.u32 %v968, 7
  %v970 = vsub.s32 0, %v969
  %v971 = vrot.slane %v967, %v970
  %v978 = vunpack.c.l.b16 %v961
  %v979 = vunpack.c.l.b16 %v962
  %v980 = vunpack.c.l.b16 %v963
  %v981 = vunpack.c.l.b16 %v964
  %v982 = vunpack.c.l.b16 %v965
  %v983 = vunpack.c.l.b16 %v966
  %v984 = vpack.c.b16 %v979, %v978
  %v985 = vpack.c.b16 %v981, %v980
  %v986 = vpack.c.b16 %v983, %v982
  %v991 = vsel %vm561, %v953, 0
  %v994 = vsel %vm561, %v954, 0
  %v997 = vsel %vm561, %v955, 0
  %v1000 = vsel %vm561, %v956, 0
  %v1003 = vsel %vm561, %v957, 0
  %v1006 = vsel %vm561, %v958, 0
  %v1009 = vsel %vm561, %v959, 0
  %v1012 = vsel %vm561, %v960, 0
  %1014 = vmatprep.subr.bf16.mxu0 0
  %1015 = vmatpush1.bf16.msra.mxu0 %v984
  %1016 = vmatprep.subr.bf16.mxu0 0
  %1017 = vmatpush1.bf16.msra.mxu0 %v985
  %1018 = vmatprep.subr.bf16.mxu0 0
  %1019 = vmatpush1.bf16.msra.mxu0 %v986
  %1020 = vmatprep.subr.bf16.mxu0 0
  %1021 = vmatpush1.bf16.msra.mxu0 0
  %1022 = vmatprep.subr.bf16.mxu0 0
  %1023 = vmatpush1.bf16.msra.mxu0 0
  %1024 = vmatprep.subr.bf16.mxu0 0
  %1025 = vmatpush1.bf16.msra.mxu0 0
  %1026 = vmatprep.subr.bf16.mxu0 0
  %1027 = vmatpush1.bf16.msra.mxu0 0
  %1028 = vmatprep.subr.bf16.mxu0 0
  %1029 = vmatpush1.bf16.msra.mxu0 0
  %1030 = vmatprep.subr.bf16.mxu0 0
  %1031 = vmatpush1.bf16.msra.mxu0 0
  %1032 = vmatprep.subr.bf16.mxu0 0
  %1033 = vmatpush1.bf16.msra.mxu0 0
  %1034 = vmatprep.subr.bf16.mxu0 0
  %1035 = vmatpush1.bf16.msra.mxu0 0
  %1036 = vmatprep.subr.bf16.mxu0 0
  %1037 = vmatpush1.bf16.msra.mxu0 0
  %1038 = vmatprep.subr.bf16.mxu0 0
  %1039 = vmatpush1.bf16.msra.mxu0 0
  %1040 = vmatprep.subr.bf16.mxu0 0
  %1041 = vmatpush1.bf16.msra.mxu0 0
  %1042 = vmatprep.subr.bf16.mxu0 0
  %1043 = vmatpush1.bf16.msra.mxu0 0
  %1044 = vmatprep.subr.bf16.mxu0 0
  %1045 = vmatpush1.bf16.msra.mxu0 0
  %1046 = vmatprep.mubr.bf16.mxu0 0
  %1047 = vmatmul.mubr.bf16.gmra.mrb[0].mxu0 %v991
  %v1048 = vpop.f32.mrb[0].mxu0
  %v1049 = vadd.f32 %v971, %v1048
  %v1050 = vpop.f32.mrb[0].mxu0
  %v1051 = vpop.f32.mrb[0].mxu0
  %v1052 = vadd.f32 %v971, %v1051
  %v1053 = vpop.f32.mrb[0].mxu0
  %1054 = vmatprep.mubr.bf16.mxu0 0
  %1055 = vmatmul.mubr.bf16.gmra.mrb[0].mxu0 %v994
  %v1056 = vpop.f32.mrb[0].mxu0
  %v1057 = vadd.f32 %v971, %v1056
  %v1058 = vpop.f32.mrb[0].mxu0
  %v1059 = vpop.f32.mrb[0].mxu0
  %v1060 = vadd.f32 %v971, %v1059
  %v1061 = vpop.f32.mrb[0].mxu0
  %1062 = vmatprep.mubr.bf16.mxu0 0
  %1063 = vmatmul.mubr.bf16.gmra.mrb[0].mxu0 %v997
  %v1064 = vpop.f32.mrb[0].mxu0
  %v1065 = vadd.f32 %v971, %v1064
  %v1066 = vpop.f32.mrb[0].mxu0
  %v1067 = vpop.f32.mrb[0].mxu0
  %v1068 = vadd.f32 %v971, %v1067
  %v1069 = vpop.f32.mrb[0].mxu0
  %1070 = vmatprep.mubr.bf16.mxu0 0
  %1071 = vmatmul.mubr.bf16.gmra.mrb[0].mxu0 %v1000
  %v1072 = vpop.f32.mrb[0].mxu0
  %v1073 = vadd.f32 %v971, %v1072
  %v1074 = vpop.f32.mrb[0].mxu0
  %v1075 = vpop.f32.mrb[0].mxu0
  %v1076 = vadd.f32 %v971, %v1075
  %v1077 = vpop.f32.mrb[0].mxu0
  %1078 = vmatprep.mubr.bf16.mxu0 0
  %1079 = vmatmul.mubr.bf16.gmra.mrb[0].mxu0 %v1003
  %v1080 = vpop.f32.mrb[0].mxu0
  %v1081 = vadd.f32 %v971, %v1080
  %v1082 = vpop.f32.mrb[0].mxu0
  %v1083 = vpop.f32.mrb[0].mxu0
  %v1084 = vadd.f32 %v971, %v1083
  %v1085 = vpop.f32.mrb[0].mxu0
  %1086 = vmatprep.mubr.bf16.mxu0 0
  %1087 = vmatmul.mubr.bf16.gmra.mrb[0].mxu0 %v1006
  %v1088 = vpop.f32.mrb[0].mxu0
  %v1089 = vadd.f32 %v971, %v1088
  %v1090 = vpop.f32.mrb[0].mxu0
  %v1091 = vpop.f32.mrb[0].mxu0
  %v1092 = vadd.f32 %v971, %v1091
  %v1093 = vpop.f32.mrb[0].mxu0
  %1094 = vmatprep.mubr.bf16.mxu0 0
  %1095 = vmatmul.mubr.bf16.gmra.mrb[0].mxu0 %v1009
  %v1096 = vpop.f32.mrb[0].mxu0
  %v1097 = vadd.f32 %v971, %v1096
  %v1098 = vpop.f32.mrb[0].mxu0
  %v1099 = vpop.f32.mrb[0].mxu0
  %v1100 = vadd.f32 %v971, %v1099
  %v1101 = vpop.f32.mrb[0].mxu0
  %1102 = vmatprep.mubr.bf16.mxu0 0
  %1103 = vmatmul.mubr.bf16.gmra.mrb[0].mxu0 %v1012
  %v1104 = vpop.f32.mrb[0].mxu0
  %v1105 = vadd.f32 %v971, %v1104
  %v1106 = vpop.f32.mrb[0].mxu0
  %v1107 = vpop.f32.mrb[0].mxu0
  %v1108 = vadd.f32 %v971, %v1107
  %v1109 = vpop.f32.mrb[0].mxu0
  %1110 = vdwg.mxu0
  %1127 = vrot.lane.b32.xlu0 %v875, 80
  %v1128 = vpop.permute.xlu0 %1127
  %1129 = vrot.lane.b32.xlu0 %v878, 80
  %v1130 = vpop.permute.xlu0 %1129
  %1131 = vrot.lane.b32.xlu0 %v883, 80
  %v1132 = vpop.permute.xlu0 %1131
  %1133 = vrot.lane.b32.xlu0 %v886, 80
  %v1134 = vpop.permute.xlu0 %1133
  %1135 = vrot.lane.b32.xlu0 %v891, 80
  %v1136 = vpop.permute.xlu0 %1135
  %1137 = vrot.lane.b32.xlu0 %v894, 80
  %v1138 = vpop.permute.xlu0 %1137
  %1139 = vrot.lane.b32.xlu0 %v899, 80
  %v1140 = vpop.permute.xlu0 %1139
  %1141 = vrot.lane.b32.xlu0 %v902, 80
  %v1142 = vpop.permute.xlu0 %1141
  %1143 = vrot.lane.b32.xlu0 %v907, 80
  %v1144 = vpop.permute.xlu0 %1143
  %1145 = vrot.lane.b32.xlu0 %v910, 80
  %v1146 = vpop.permute.xlu0 %1145
  %1147 = vrot.lane.b32.xlu0 %v915, 80
  %v1148 = vpop.permute.xlu0 %1147
  %1149 = vrot.lane.b32.xlu0 %v918, 80
  %v1150 = vpop.permute.xlu0 %1149
  %1151 = vrot.lane.b32.xlu0 %v923, 80
  %v1152 = vpop.permute.xlu0 %1151
  %1153 = vrot.lane.b32.xlu0 %v926, 80
  %v1154 = vpop.permute.xlu0 %1153
  %1155 = vrot.lane.b32.xlu0 %v931, 80
  %v1156 = vpop.permute.xlu0 %1155
  %1157 = vrot.lane.b32.xlu0 %v934, 80
  %v1158 = vpop.permute.xlu0 %1157
  %v1175 = vadd.f32 %v1049, %v1128
  %v1176 = vadd.f32 %v1052, %v1130
  %v1177 = vadd.f32 %v1057, %v1132
  %v1178 = vadd.f32 %v1060, %v1134
  %v1179 = vadd.f32 %v1065, %v1136
  %v1180 = vadd.f32 %v1068, %v1138
  %v1181 = vadd.f32 %v1073, %v1140
  %v1182 = vadd.f32 %v1076, %v1142
  %v1183 = vadd.f32 %v1081, %v1144
  %v1184 = vadd.f32 %v1084, %v1146
  %v1185 = vadd.f32 %v1089, %v1148
  %v1186 = vadd.f32 %v1092, %v1150
  %v1187 = vadd.f32 %v1097, %v1152
  %v1188 = vadd.f32 %v1100, %v1154
  %v1189 = vadd.f32 %v1105, %v1156
  %v1190 = vadd.f32 %v1108, %v1158
  %v1191 = vmax.f32 %v1175, 0.0
  %v1192 = vmax.f32 %v1176, 0.0
  %v1193 = vmax.f32 %v1177, 0.0
  %v1194 = vmax.f32 %v1178, 0.0
  %v1195 = vmax.f32 %v1179, 0.0
  %v1196 = vmax.f32 %v1180, 0.0
  %v1197 = vmax.f32 %v1181, 0.0
  %v1198 = vmax.f32 %v1182, 0.0
  %v1199 = vmax.f32 %v1183, 0.0
  %v1200 = vmax.f32 %v1184, 0.0
  %v1201 = vmax.f32 %v1185, 0.0
  %v1202 = vmax.f32 %v1186, 0.0
  %v1203 = vmax.f32 %v1187, 0.0
  %v1204 = vmax.f32 %v1188, 0.0
  %v1205 = vmax.f32 %v1189, 0.0
  %v1206 = vmax.f32 %v1190, 0.0
  %v1207 = vld [vmem:[%s2 + $0x6] sm:$0x1]
  %v1208 = vld [vmem:[%s2 + $0x5] sm:$0x1]
  %1210 = vset.pattern.permute.xlu0 0
  %1211 = vperm.xlu0 %1210, %v1208
  %v1212 = vpop.permute.xlu0 %1211
  %v1215 = vsel %vm561, %v1207, 0
  %v1218 = vsel %vm561, %v1191, 0
  %v1221 = vsel %vm561, %v1192, 0
  %v1224 = vsel %vm561, %v1193, 0
  %v1227 = vsel %vm561, %v1194, 0
  %v1230 = vsel %vm561, %v1195, 0
  %v1233 = vsel %vm561, %v1196, 0
  %v1236 = vsel %vm561, %v1197, 0
  %v1239 = vsel %vm561, %v1198, 0
  %v1242 = vsel %vm561, %v1199, 0
  %v1245 = vsel %vm561, %v1200, 0
  %v1248 = vsel %vm561, %v1201, 0
  %v1251 = vsel %vm561, %v1202, 0
  %v1254 = vsel %vm561, %v1203, 0
  %v1257 = vsel %vm561, %v1204, 0
  %v1260 = vsel %vm561, %v1205, 0
  %v1263 = vsel %vm561, %v1206, 0
  %1265 = vmatprep.subr.mxu0 0.0
  %1266 = vmatpush1.xpose.msra.mxu0 %v1218
  %1267 = vmatprep.subr.mxu0 0.0
  %1268 = vmatpush1.xpose.msra.mxu0 %v1221
  %1269 = vmatprep.subr.mxu0 0.0
  %1270 = vmatpush1.xpose.msra.mxu0 %v1224
  %1271 = vmatprep.subr.mxu0 0.0
  %1272 = vmatpush1.xpose.msra.mxu0 %v1227
  %1273 = vmatprep.subr.mxu0 0.0
  %1274 = vmatpush1.xpose.msra.mxu0 %v1230
  %1275 = vmatprep.subr.mxu0 0.0
  %1276 = vmatpush1.xpose.msra.mxu0 %v1233
  %1277 = vmatprep.subr.mxu0 0.0
  %1278 = vmatpush1.xpose.msra.mxu0 %v1236
  %1279 = vmatprep.subr.mxu0 0.0
  %1280 = vmatpush1.xpose.msra.mxu0 %v1239
  %1281 = vmatprep.subr.mxu0 0.0
  %1282 = vmatpush1.xpose.msra.mxu0 %v1242
  %1283 = vmatprep.subr.mxu0 0.0
  %1284 = vmatpush1.xpose.msra.mxu0 %v1245
  %1285 = vmatprep.subr.mxu0 0.0
  %1286 = vmatpush1.xpose.msra.mxu0 %v1248
  %1287 = vmatprep.subr.mxu0 0.0
  %1288 = vmatpush1.xpose.msra.mxu0 %v1251
  %1289 = vmatprep.subr.mxu0 0.0
  %1290 = vmatpush1.xpose.msra.mxu0 %v1254
  %1291 = vmatprep.subr.mxu0 0.0
  %1292 = vmatpush1.xpose.msra.mxu0 %v1257
  %1293 = vmatprep.subr.mxu0 0.0
  %1294 = vmatpush1.xpose.msra.mxu0 %v1260
  %1295 = vmatprep.subr.mxu0 0.0
  %1296 = vmatpush1.xpose.msra.mxu0 %v1263
  %1297 = vmatprep.subr.mxu0 0.0
  %1298 = vmatpush1.xpose.msra.mxu0 0.0
  %1299 = vmatprep.subr.mxu0 0.0
  %1300 = vmatpush1.xpose.msra.mxu0 0.0
  %1301 = vmatprep.subr.mxu0 0.0
  %1302 = vmatpush1.xpose.msra.mxu0 0.0
  %1303 = vmatprep.subr.mxu0 0.0
  %1304 = vmatpush1.xpose.msra.mxu0 0.0
  %1305 = vmatprep.subr.mxu0 0.0
  %1306 = vmatpush1.xpose.msra.mxu0 0.0
  %1307 = vmatprep.subr.mxu0 0.0
  %1308 = vmatpush1.xpose.msra.mxu0 0.0
  %1309 = vmatprep.subr.mxu0 0.0
  %1310 = vmatpush1.xpose.msra.mxu0 0.0
  %1311 = vmatprep.subr.mxu0 0.0
  %1312 = vmatpush1.xpose.msra.mxu0 0.0
  %1313 = vmatprep.subr.mxu0 0.0
  %1314 = vmatpush1.xpose.msra.mxu0 0.0
  %1315 = vmatprep.subr.mxu0 0.0
  %1316 = vmatpush1.xpose.msra.mxu0 0.0
  %1317 = vmatprep.subr.mxu0 0.0
  %1318 = vmatpush1.xpose.msra.mxu0 0.0
  %1319 = vmatprep.subr.mxu0 0.0
  %1320 = vmatpush1.xpose.msra.mxu0 0.0
  %1321 = vmatprep.subr.mxu0 0.0
  %1322 = vmatpush1.xpose.msra.mxu0 0.0
  %1323 = vmatprep.subr.mxu0 0.0
  %1324 = vmatpush1.xpose.msra.mxu0 0.0
  %1325 = vmatprep.subr.mxu0 0.0
  %1326 = vmatpush1.xpose.msra.mxu0 0.0
  %1327 = vmatprep.subr.mxu0 0.0
  %1328 = vmatpush1.xpose.msra.mxu0 0.0
  %1329 = vmatprep.mubr.f32.mxu0 0.0
  %1330 = vmatmul.mubr.f32.gmra.mrb[0].mxu0 %v1215
  %v1331 = vpop.f32.mrb[0].mxu0
  %v1332 = vadd.f32 %v1212, %v1331
  %v1333 = vpop.f32.mrb[0].mxu0
  %1334 = vdwg.mxu0
  %v1335 = vmax.f32 %v1332, 0.0
  %1336 = vset.pattern.permute.xlu0 1
  %1337 = vperm.xlu0 %1336, %v1208
  %v1338 = vpop.permute.xlu0 %1337
  %v1340 = vmul.f32 %v1338, %v1335
  %1341 = vset.pattern.permute.xlu0 2
  %1342 = vperm.xlu0 %1341, %v1208
  %v1343 = vpop.permute.xlu0 %1342
  %v1345 = vadd.f32 %v1340, %v1343
  %vm1346 = vcmask 516096
  %v1347 = vsel %vm1346, %v1345, -inf
  %1348 = vmax.xlane.f32.xlu0 %v1347
  %v1349 = vpop.xlane.xlu0 %1348
  %v1350 = vsub.f32 %v1345, %v1349
  %v1351 = vmul.f32 %v1350, 1.442695
  %v1352 = vpow.pop %v1351
  %v1353 = vsel %vm1346, %v1352, 0.0
  %1354 = vadd.xlane.f32.xlu0 %v1353
  %v1355 = vpop.xlane.xlu0 %1354
  %v1356 = vrcp.pop %v1355
  %v1357 = vmul.f32 %v1352, %v1356
  %vm1358 = vcmask 1040896
  %v1359 = vsel %vm1358, %v1345, -inf
  %1360 = vmax.xlane.f32.xlu0 %v1359
  %v1361 = vpop.xlane.xlu0 %1360
  %v1362 = vsub.f32 %v1345, %v1361
  %v1363 = vmul.f32 %v1362, 1.442695
  %v1364 = vpow.pop %v1363
  %1366 = vrot.lane.b32.xlu0 %v1364, 64
  %v1367 = vpop.permute.xlu0 %1366
  %v1369 = vsel %vm1346, %v1367, 0.0
  %1370 = vadd.xlane.f32.xlu0 %v1369
  %v1371 = vpop.xlane.xlu0 %1370
  %v1372 = vrcp.pop %v1371
  %v1373 = vmul.f32 %v1364, %v1372
  %v1375 = vrot.slane %v1373, 7
  %1376 = vrot.lane.b32.xlu0 %v1375, 64
  %v1377 = vpop.permute.xlu0 %1376
  %vm1379 = vcmask 1040384
  %v1380 = vsel %vm1379, %v1357, %v1377
  %vm1381 = vcmask 517120
  %1382 = vst.msk [vmem:[%s3] sm:$0x3] %vm1381, %v1380
  // Predicated region
  $region14: #{image_components_to_mask.1} parent=0 // pred_check
    _
  $region15: #{image_components_to_mask.1} parent=0 // pred_check_branch
    %1384 = sbr.rel (0) target = $region17
  $region16: #{image_components_to_mask.1} parent=0 // pred_region
    _
  $region17: #{image_components_to_mask.1} parent=0 // pred_fallthru
    _
  // Predicated region
  $region18: #{image_components_to_mask.1} parent=0 // pred_check
    _
  $region19: #{image_components_to_mask.1} parent=0 // pred_check_branch
    %1386 = sbr.rel (0) target = $region21
  $region20: #{image_components_to_mask.1} parent=0 // pred_region
    _
  $region21: #{image_components_to_mask.1} parent=0 // pred_fallthru
    _

</llo_original>
